<compile_context>
chip_gen: v7x
topology: tpu7x:2x2x1
jax: 0.10.0
libtpu: 0.0.40
codegen_flags: <defaults>
</compile_context>

<pallas_src>
import jax
import jax.numpy as jnp
from jax.experimental import pallas as pl
from jax.experimental.pallas import tpu as pltpu

C_IN = 300
C_OUT = 300


def _round_up(n, m):
    return ((n + m - 1) // m) * m


def _cdiv(a, b):
    return -(-a // b)


def _conv1x1_kernel(x_ref, wt_ref, b_ref, o_ref):
    # x_ref:  (tm, 300)   row tile of flattened (B*L, Cin), channels-last
    # wt_ref: (300, 300)  full transposed weight, resident across the grid
    # b_ref:  (1, 300)    full bias, resident across the grid
    # o_ref:  (tm, 300)
    acc = jnp.dot(x_ref[...], wt_ref[...], preferred_element_type=jnp.float32)
    # Single broadcast bias epilogue (VPU filler under the MXU).
    o_ref[...] = (acc + b_ref[...].astype(jnp.float32)).astype(o_ref.dtype)


def _build_call(tm, m_rows, out_dtype, flops, bytes_accessed):
    grid = (_cdiv(m_rows, tm),)
    return pl.pallas_call(
        _conv1x1_kernel,
        out_shape=jax.ShapeDtypeStruct((m_rows, C_OUT), out_dtype),
        grid_spec=pltpu.PrefetchScalarGridSpec(
            num_scalar_prefetch=0,
            grid=grid,
            in_specs=[
                # Last dim == full array dim -> legal; lane layout padded
                # internally by Mosaic (no extra HBM bytes).
                pl.BlockSpec((tm, C_IN), lambda i: (i, 0)),
                # Constant index_maps: weight/bias fetched once for the grid.
                pl.BlockSpec((C_IN, C_OUT), lambda i: (0, 0)),
                pl.BlockSpec((1, C_OUT), lambda i: (0, 0)),
            ],
            out_specs=pl.BlockSpec((tm, C_OUT), lambda i: (i, 0)),
        ),
        compiler_params=pltpu.CompilerParams(
            dimension_semantics=("parallel",)),
        cost_estimate=pl.CostEstimate(
            flops=flops, transcendentals=0, bytes_accessed=bytes_accessed),
    )


def conv_ls_w_forward(x, weight, bias, *, tm=1024, use_bf16=False):
    """1x1 Conv1d over the channel dim, channels-last.

    x: (B, L, 300); weight: (300, 300) [out, in]; bias: (300,).
    Equivalent to Conv1d(300,300,1)(x.permute(0,2,1)).permute(0,2,1).
    """
    B, L, C = x.shape
    assert C == C_IN
    M = B * L
    out_dtype = x.dtype

    x2 = x.reshape(M, C_IN)
    wt = weight.T                    # (Cin, Cout)
    b2 = bias.reshape(1, C_OUT)

    # Only pad rows when M is not sublane-aligned (adds < 8 garbage rows,
    # sliced back off below).  Common case (M % 8 == 0): zero extra copies.
    m_rows = _round_up(M, 8)
    if m_rows != M:
        x2 = jnp.pad(x2, ((0, m_rows - M), (0, 0)))

    # Row tile selection.
    if m_rows <= tm:
        if m_rows >= 1024:
            # Split into >= 2 grid steps so both v7x TensorCores get work.
            tm_eff = _round_up(_cdiv(m_rows, 2), 8)
        else:
            tm_eff = m_rows          # one step covers everything
    else:
        tm_eff = tm

    if use_bf16:
        # Opt-in: halves input HBM traffic and uses the bf16-native MXU on
        # v6e/v7x.  Numerics no longer bit-match the f32 PyTorch Conv1d.
        x2 = x2.astype(jnp.bfloat16)
        wt = wt.astype(jnp.bfloat16)

    flops = 2 * M * C_IN * C_OUT
    bytes_accessed = (x2.dtype.itemsize * m_rows * C_IN
                      + wt.dtype.itemsize * C_IN * C_OUT
                      + out_dtype.itemsize * m_rows * C_OUT
                      + 4 * C_OUT)

    out = _build_call(tm_eff, m_rows, out_dtype, flops, bytes_accessed)(
        x2, wt, b2)

    if m_rows != M:
        out = out[:M]
    return out.reshape(B, L, C_OUT)


if __name__ == "__main__":
    key = jax.random.PRNGKey(0)
    k_x, k_w, k_b, k_t0 = jax.random.split(key, 4)

    # Small shapes consistent with the module: batch=2, seq=8, embedding=300.
    B, L = 2, 8
    rep_dim, num_class = 4, 3

    x = jax.random.normal(k_x, (B, L, C_IN), dtype=jnp.float32)

    # Deterministic parameter init (mimics Conv1d's uniform fan-in scale).
    bound = 1.0 / (C_IN ** 0.5)
    weight = jax.random.uniform(k_w, (C_OUT, C_IN), jnp.float32, -bound, bound)
    bias = jax.random.uniform(k_b, (C_OUT,), jnp.float32, -bound, bound)
    # TODO(synk): t0 is an nn.Parameter in the module but unused in forward().
    t0 = jax.random.uniform(k_t0, (num_class, rep_dim, 300), jnp.float32)

    out = conv_ls_w_forward(x, weight, bias)
    out = jax.block_until_ready(out)

    # Correctness check against plain-JAX reference of the 1x1 conv.
    ref = jnp.einsum("blc,oc->blo", x, weight) + bias
    assert out.shape == (B, L, C_OUT)
    assert jnp.allclose(out, ref, atol=1e-4, rtol=1e-4)

    print("KERNEL_OK")
</pallas_src>

<mosaic_0001>
module attributes {stable_mosaic.version = 11 : i64} {
  func.func @_conv1x1_kernel(%arg0: i32, %arg1: memref<16x300xf32, #tpu.memory_space<vmem>>, %arg2: memref<300x300xf32, #tpu.memory_space<vmem>>, %arg3: memref<1x300xf32, #tpu.memory_space<vmem>>, %arg4: memref<16x300xf32, #tpu.memory_space<vmem>>) attributes {dimension_semantics = [#tpu.dimension_semantics<parallel>], iteration_bounds = array<i64: 1>, scalar_prefetch = 0 : i64, scratch_operands = 0 : i64, tpu.core_type = #tpu.core_type<tc>, window_params = [{transform_indices = @transform_0, window_bounds = array<i64: 16, 300>}, {pipeline_mode = #tpu.pipeline_mode<synchronous>, transform_indices = @transform_1, window_bounds = array<i64: 300, 300>}, {pipeline_mode = #tpu.pipeline_mode<synchronous>, transform_indices = @transform_2, window_bounds = array<i64: 1, 300>}, {transform_indices = @transform_3, window_bounds = array<i64: 16, 300>}]} {
    %c0 = arith.constant 0 : index
    %c0_0 = arith.constant 0 : index
    %0 = vector.load %arg1[%c0, %c0_0] : memref<16x300xf32, #tpu.memory_space<vmem>>, vector<16x300xf32>
    %c0_1 = arith.constant 0 : index
    %c0_2 = arith.constant 0 : index
    %1 = vector.load %arg2[%c0_1, %c0_2] : memref<300x300xf32, #tpu.memory_space<vmem>>, vector<300x300xf32>
    %cst = arith.constant dense<0.000000e+00> : vector<16x300xf32>
    %2 = tpu.matmul %0, %1, %cst {dimension_numbers = #tpu.dot_dimension_numbers<[1], [0], [0], [1], [0, 0, 1, 1], [], []>} : vector<16x300xf32>, vector<300x300xf32>, vector<16x300xf32> -> vector<16x300xf32>
    %c0_3 = arith.constant 0 : index
    %c0_4 = arith.constant 0 : index
    %3 = vector.load %arg3[%c0_3, %c0_4] : memref<1x300xf32, #tpu.memory_space<vmem>>, vector<1x300xf32>
    %4 = vector.broadcast %3 : vector<1x300xf32> to vector<16x300xf32>
    %5 = arith.addf %2, %4 : vector<16x300xf32>
    %c0_5 = arith.constant 0 : index
    %c0_6 = arith.constant 0 : index
    %6 = vector.load %arg4[%c0_5, %c0_6] : memref<16x300xf32, #tpu.memory_space<vmem>>, vector<16x300xf32>
    tpu.vector_store %arg4[%c0_5, %c0_6], %5 {strides = array<i32>} : memref<16x300xf32, #tpu.memory_space<vmem>>, vector<16x300xf32>,
    return
  }
  func.func @transform_0(%arg0: i32) -> (i32, i32) {
    %c0_i32 = arith.constant 0 : i32
    %c0_i32_0 = arith.constant 0 : i32
    return %arg0, %c0_i32 : i32, i32
  }
  func.func @transform_1(%arg0: i32) -> (i32, i32) {
    %c0_i32 = arith.constant 0 : i32
    %c0_i32_0 = arith.constant 0 : i32
    %c0_i32_1 = arith.constant 0 : i32
    return %c0_i32, %c0_i32_0 : i32, i32
  }
  func.func @transform_2(%arg0: i32) -> (i32, i32) {
    %c0_i32 = arith.constant 0 : i32
    %c0_i32_0 = arith.constant 0 : i32
    %c0_i32_1 = arith.constant 0 : i32
    return %c0_i32, %c0_i32_0 : i32, i32
  }
  func.func @transform_3(%arg0: i32) -> (i32, i32) {
    %c0_i32 = arith.constant 0 : i32
    %c0_i32_0 = arith.constant 0 : i32
    return %arg0, %c0_i32 : i32, i32
  }
}

</mosaic_0001>

<llo_original>
// kernel: tpu_custom_call.1
$region0: #{tpu_custom_call.1}
  #allocation0 [shape = 'u32[]', space=smem, size = 0x4, offset = 0x4, fixed_abs, tag = 'smem constant byte address 0x4 - core index']
  #allocation1 [shape = 'u32[144,128]{1,0:T(1,128)}', space=vmem, size = 0x12000, scoped, tag = 'internal scratch']
  %s0 = inlined_call_operand.hbm [shape: f32[16,300], index: 0, kind: input, shape index: {}]
  %s1 = inlined_call_operand.hbm [shape: f32[300,300], index: 1, kind: input, shape index: {}]
  %s2 = inlined_call_operand.vmem [shape: f32[1,300], index: 2, kind: input, shape index: {}]
  %s3 = inlined_call_operand.hbm [shape: f32[16,300], index: 3, kind: output, shape index: {}]
  %s4 = sld [smem:[#allocation0]]
  $region30: #{tpu_custom_call.1} parent=0
    _
  %s6 = ssub.s32 1, %s4
  %s7 = scalar_select 0, %s6, %s4
  $region1: #{tpu_custom_call.1} parent=0
    #allocation2 [shape = 'u8[24576]{0}', space=vmem, size = 0x6000, scoped, tag = 'input window, operand 0, single buffered']
    #allocation3 [shape = 's32[1]{0}', space=sflag, size = 0x4, scoped, tag = 'scoped memory for tpu_custom_call.1']
    #allocation4 [shape = 's32[1]{0}', space=sflag, size = 0x4, scoped, tag = 'scoped memory for tpu_custom_call.1']
    #allocation5 [shape = 'u8[466944]{0}', space=vmem, size = 0x72000, scoped, tag = 'input window, operand 1, single buffered']
    #allocation6 [shape = 's32[1]{0}', space=sflag, size = 0x4, scoped, tag = 'scoped memory for tpu_custom_call.1']
    #allocation7 [shape = 'u8[24576]{0}', space=vmem, size = 0x6000, scoped, tag = 'output window, operand 0, single buffered']
    %8 = vsyncpa [#allocation3], 0
    %9 = vsyncpa [#allocation6], 0
    %10 = vsyncpa [#allocation4], 0
    // Predicated region
    $region2: #{tpu_custom_call.1} parent=1 // pred_check
      _
    $region3: #{tpu_custom_call.1} parent=1 // pred_check_branch
      %12 = sbr.rel (0) target = $region5
    $region4: #{tpu_custom_call.1} parent=1 // pred_region
      %s14 = ssub.s32 768, 768
      %15 = vsyncadd [#allocation3], %s14
      %s16 = sshll.u32 [#allocation2], 4
      %s17 = int_to_ptr.vmem [resolvable:$true] %s16
      %22 = dma.hbm_to_vmem [thread:$0]  %s0, 768, %s17, [#allocation3], 384, 384, 24
    $region5: #{tpu_custom_call.1} parent=1 // pred_fallthru
      _
    // Predicated region
    $region6: #{tpu_custom_call.1} parent=1 // pred_check
      _
    $region7: #{tpu_custom_call.1} parent=1 // pred_check_branch
      %24 = sbr.rel (0) target = $region9
    $region8: #{tpu_custom_call.1} parent=1 // pred_region
      %s26 = ssub.s32 14592, 14592
      %27 = vsyncadd [#allocation6], %s26
      %s28 = sshll.u32 [#allocation5], 4
      %s29 = int_to_ptr.vmem [resolvable:$true] %s28
      %34 = dma.hbm_to_vmem [thread:$0]  %s1, 14592, %s29, [#allocation6], 384, 384, 24
    $region9: #{tpu_custom_call.1} parent=1 // pred_fallthru
      _
    // Predicated region
    $region10: #{tpu_custom_call.1} parent=1 // pred_check
      _
    $region11: #{tpu_custom_call.1} parent=1 // pred_check_branch
      %36 = sbr.rel (0) target = $region13
    $region12: #{tpu_custom_call.1} parent=1 // pred_region
      _
    $region13: #{tpu_custom_call.1} parent=1 // pred_fallthru
      _
    // Predicated region
    $region14: #{tpu_custom_call.1} parent=1 // pred_check
      _
    $region15: #{tpu_custom_call.1} parent=1 // pred_check_branch
      %38 = sbr.rel (0) target = $region17
    $region16: #{tpu_custom_call.1} parent=1 // pred_region
      %39 = dma.done [#allocation3], 768
    $region17: #{tpu_custom_call.1} parent=1 // pred_fallthru
      _
    // Predicated region
    $region18: #{tpu_custom_call.1} parent=1 // pred_check
      _
    $region19: #{tpu_custom_call.1} parent=1 // pred_check_branch
      %41 = sbr.rel (0) target = $region21
    $region20: #{tpu_custom_call.1} parent=1 // pred_region
      %42 = dma.done [#allocation6], 14592
    $region21: #{tpu_custom_call.1} parent=1 // pred_fallthru
      _
    %v43 = vld [vmem:[#allocation2] sm:$0xff]
    %v44 = vld [vmem:[#allocation2 + $0x8] sm:$0xff]
    %v45 = vld [vmem:[#allocation2 + $0x10] sm:$0xff]
    %v46 = vld [vmem:[#allocation2 + $0x18] sm:$0xff]
    %v47 = vld [vmem:[#allocation2 + $0x20] sm:$0xff]
    %v48 = vld [vmem:[#allocation2 + $0x28] sm:$0xff]
    %v49 = vld [vmem:[#allocation5] sm:$0xff]
    %v50 = vld [vmem:[#allocation5 + $0x8] sm:$0xff]
    %v51 = vld [vmem:[#allocation5 + $0x10] sm:$0xff]
    %v52 = vld [vmem:[#allocation5 + $0x18] sm:$0xff]
    %v53 = vld [vmem:[#allocation5 + $0x20] sm:$0xff]
    %v54 = vld [vmem:[#allocation5 + $0x28] sm:$0xff]
    %v55 = vld [vmem:[#allocation5 + $0x30] sm:$0xff]
    %v56 = vld [vmem:[#allocation5 + $0x38] sm:$0xff]
    %v57 = vld [vmem:[#allocation5 + $0x40] sm:$0xff]
    %v58 = vld [vmem:[#allocation5 + $0x48] sm:$0xff]
    %v59 = vld [vmem:[#allocation5 + $0x50] sm:$0xff]
    %v60 = vld [vmem:[#allocation5 + $0x58] sm:$0xff]
    %v61 = vld [vmem:[#allocation5 + $0x60] sm:$0xff]
    %v62 = vld [vmem:[#allocation5 + $0x68] sm:$0xff]
    %v63 = vld [vmem:[#allocation5 + $0x70] sm:$0xff]
    %v64 = vld [vmem:[#allocation5 + $0x78] sm:$0xff]
    %v65 = vld [vmem:[#allocation5 + $0x80] sm:$0xff]
    %v66 = vld [vmem:[#allocation5 + $0x88] sm:$0xff]
    %v67 = vld [vmem:[#allocation5 + $0x90] sm:$0xff]
    %v68 = vld [vmem:[#allocation5 + $0x98] sm:$0xff]
    %v69 = vld [vmem:[#allocation5 + $0xa0] sm:$0xff]
    %v70 = vld [vmem:[#allocation5 + $0xa8] sm:$0xff]
    %v71 = vld [vmem:[#allocation5 + $0xb0] sm:$0xff]
    %v72 = vld [vmem:[#allocation5 + $0xb8] sm:$0xff]
    %v73 = vld [vmem:[#allocation5 + $0xc0] sm:$0xff]
    %v74 = vld [vmem:[#allocation5 + $0xc8] sm:$0xff]
    %v75 = vld [vmem:[#allocation5 + $0xd0] sm:$0xff]
    %v76 = vld [vmem:[#allocation5 + $0xd8] sm:$0xff]
    %v77 = vld [vmem:[#allocation5 + $0xe0] sm:$0xff]
    %v78 = vld [vmem:[#allocation5 + $0xe8] sm:$0xff]
    %v79 = vld [vmem:[#allocation5 + $0xf0] sm:$0xff]
    %v80 = vld [vmem:[#allocation5 + $0xf8] sm:$0xff]
    %v81 = vld [vmem:[#allocation5 + $0x100] sm:$0xff]
    %v82 = vld [vmem:[#allocation5 + $0x108] sm:$0xff]
    %v83 = vld [vmem:[#allocation5 + $0x110] sm:$0xff]
    %v84 = vld [vmem:[#allocation5 + $0x118] sm:$0xff]
    %v85 = vld [vmem:[#allocation5 + $0x120] sm:$0xff]
    %v86 = vld [vmem:[#allocation5 + $0x128] sm:$0xff]
    %v87 = vld [vmem:[#allocation5 + $0x130] sm:$0xff]
    %v88 = vld [vmem:[#allocation5 + $0x138] sm:$0xff]
    %v89 = vld [vmem:[#allocation5 + $0x140] sm:$0xff]
    %v90 = vld [vmem:[#allocation5 + $0x148] sm:$0xff]
    %v91 = vld [vmem:[#allocation5 + $0x150] sm:$0xff]
    %v92 = vld [vmem:[#allocation5 + $0x158] sm:$0xff]
    %v93 = vld [vmem:[#allocation5 + $0x160] sm:$0xff]
    %v94 = vld [vmem:[#allocation5 + $0x168] sm:$0xff]
    %v95 = vld [vmem:[#allocation5 + $0x170] sm:$0xff]
    %v96 = vld [vmem:[#allocation5 + $0x178] sm:$0xff]
    %v97 = vld [vmem:[#allocation5 + $0x180] sm:$0xff]
    %v98 = vld [vmem:[#allocation5 + $0x188] sm:$0xff]
    %v99 = vld [vmem:[#allocation5 + $0x190] sm:$0xff]
    %v100 = vld [vmem:[#allocation5 + $0x198] sm:$0xff]
    %v101 = vld [vmem:[#allocation5 + $0x1a0] sm:$0xff]
    %v102 = vld [vmem:[#allocation5 + $0x1a8] sm:$0xff]
    %v103 = vld [vmem:[#allocation5 + $0x1b0] sm:$0xff]
    %v104 = vld [vmem:[#allocation5 + $0x1b8] sm:$0xff]
    %v105 = vld [vmem:[#allocation5 + $0x1c0] sm:$0xff]
    %v106 = vld [vmem:[#allocation5 + $0x1c8] sm:$0xff]
    %v107 = vld [vmem:[#allocation5 + $0x1d0] sm:$0xff]
    %v108 = vld [vmem:[#allocation5 + $0x1d8] sm:$0xff]
    %v109 = vld [vmem:[#allocation5 + $0x1e0] sm:$0xff]
    %v110 = vld [vmem:[#allocation5 + $0x1e8] sm:$0xff]
    %v111 = vld [vmem:[#allocation5 + $0x1f0] sm:$0xff]
    %v112 = vld [vmem:[#allocation5 + $0x1f8] sm:$0xff]
    %v113 = vld [vmem:[#allocation5 + $0x200] sm:$0xff]
    %v114 = vld [vmem:[#allocation5 + $0x208] sm:$0xff]
    %v115 = vld [vmem:[#allocation5 + $0x210] sm:$0xff]
    %v116 = vld [vmem:[#allocation5 + $0x218] sm:$0xff]
    %v117 = vld [vmem:[#allocation5 + $0x220] sm:$0xff]
    %v118 = vld [vmem:[#allocation5 + $0x228] sm:$0xff]
    %v119 = vld [vmem:[#allocation5 + $0x230] sm:$0xff]
    %v120 = vld [vmem:[#allocation5 + $0x238] sm:$0xff]
    %v121 = vld [vmem:[#allocation5 + $0x240] sm:$0xff]
    %v122 = vld [vmem:[#allocation5 + $0x248] sm:$0xff]
    %v123 = vld [vmem:[#allocation5 + $0x250] sm:$0xff]
    %v124 = vld [vmem:[#allocation5 + $0x258] sm:$0xff]
    %v125 = vld [vmem:[#allocation5 + $0x260] sm:$0xff]
    %v126 = vld [vmem:[#allocation5 + $0x268] sm:$0xff]
    %v127 = vld [vmem:[#allocation5 + $0x270] sm:$0xff]
    %v128 = vld [vmem:[#allocation5 + $0x278] sm:$0xff]
    %v129 = vld [vmem:[#allocation5 + $0x280] sm:$0xff]
    %v130 = vld [vmem:[#allocation5 + $0x288] sm:$0xff]
    %v131 = vld [vmem:[#allocation5 + $0x290] sm:$0xff]
    %v132 = vld [vmem:[#allocation5 + $0x298] sm:$0xff]
    %v133 = vld [vmem:[#allocation5 + $0x2a0] sm:$0xff]
    %v134 = vld [vmem:[#allocation5 + $0x2a8] sm:$0xff]
    %v135 = vld [vmem:[#allocation5 + $0x2b0] sm:$0xff]
    %v136 = vld [vmem:[#allocation5 + $0x2b8] sm:$0xff]
    %v137 = vld [vmem:[#allocation5 + $0x2c0] sm:$0xff]
    %v138 = vld [vmem:[#allocation5 + $0x2c8] sm:$0xff]
    %v139 = vld [vmem:[#allocation5 + $0x2d0] sm:$0xff]
    %v140 = vld [vmem:[#allocation5 + $0x2d8] sm:$0xff]
    %v141 = vld [vmem:[#allocation5 + $0x2e0] sm:$0xff]
    %v142 = vld [vmem:[#allocation5 + $0x2e8] sm:$0xff]
    %v143 = vld [vmem:[#allocation5 + $0x2f0] sm:$0xff]
    %v144 = vld [vmem:[#allocation5 + $0x2f8] sm:$0xff]
    %v145 = vld [vmem:[#allocation5 + $0x300] sm:$0xff]
    %v146 = vld [vmem:[#allocation5 + $0x308] sm:$0xff]
    %v147 = vld [vmem:[#allocation5 + $0x310] sm:$0xff]
    %v148 = vld [vmem:[#allocation5 + $0x318] sm:$0xff]
    %v149 = vld [vmem:[#allocation5 + $0x320] sm:$0xff]
    %v150 = vld [vmem:[#allocation5 + $0x328] sm:$0xff]
    %v151 = vld [vmem:[#allocation5 + $0x330] sm:$0xff]
    %v152 = vld [vmem:[#allocation5 + $0x338] sm:$0xff]
    %v153 = vld [vmem:[#allocation5 + $0x340] sm:$0xff]
    %v154 = vld [vmem:[#allocation5 + $0x348] sm:$0xff]
    %v155 = vld [vmem:[#allocation5 + $0x350] sm:$0xff]
    %v156 = vld [vmem:[#allocation5 + $0x358] sm:$0xff]
    %v157 = vld [vmem:[#allocation5 + $0x360] sm:$0xff]
    %v158 = vld [vmem:[#allocation5 + $0x368] sm:$0xff]
    %v159 = vld [vmem:[#allocation5 + $0x370] sm:$0xff]
    %v160 = vld [vmem:[#allocation5 + $0x378] sm:$0xf]
    %v161 = vld [vmem:[#allocation5 + $0x380] sm:$0xf]
    %v162 = vld [vmem:[#allocation5 + $0x388] sm:$0xf]
    %v163 = vld [vmem:[%s2] sm:$0x7]
    %v165 = vlaneseq
    %v166 = vshrl.u32 %v165, 7
    %v167 = vsub.s32 0, %v166
    %v168 = vrot.slane %v163, %v167
    %v169 = vlaneseq
    %v170 = vshrl.u32 %v169, 7
    %v171 = vsub.s32 1, %v170
    %v172 = vrot.slane %v163, %v171
    %v173 = vlaneseq
    %v174 = vshrl.u32 %v173, 7
    %v175 = vsub.s32 2, %v174
    %v176 = vrot.slane %v163, %v175
    %vm180 = vcmask 359424
    %v182 = vsel %vm180, %v45, 0
    %v185 = vsel %vm180, %v48, 0
    %vm187 = vcmask 1043456
    %v189 = vsel %vm187, %v160, 0
    %v192 = vsel %vm187, %v161, 0
    %v195 = vsel %vm187, %v162, 0
    %197 = vmatprep.subr.mxu0 %v50
    %198 = vmatpush1.msra.mxu0 %v49
    %199 = vmatprep.subr.mxu0 %v53
    %200 = vmatpush1.msra.mxu0 %v52
    %201 = vmatprep.subr.mxu0 %v56
    %202 = vmatpush1.msra.mxu0 %v55
    %203 = vmatprep.subr.mxu0 %v59
    %204 = vmatpush1.msra.mxu0 %v58
    %205 = vmatprep.subr.mxu0 %v62
    %206 = vmatpush1.msra.mxu0 %v61
    %207 = vmatprep.subr.mxu0 %v65
    %208 = vmatpush1.msra.mxu0 %v64
    %209 = vmatprep.subr.mxu0 %v68
    %210 = vmatpush1.msra.mxu0 %v67
    %211 = vmatprep.subr.mxu0 %v71
    %212 = vmatpush1.msra.mxu0 %v70
    %213 = vmatprep.subr.mxu0 %v74
    %214 = vmatpush1.msra.mxu0 %v73
    %215 = vmatprep.subr.mxu0 %v77
    %216 = vmatpush1.msra.mxu0 %v76
    %217 = vmatprep.subr.mxu0 %v80
    %218 = vmatpush1.msra.mxu0 %v79
    %219 = vmatprep.subr.mxu0 %v83
    %220 = vmatpush1.msra.mxu0 %v82
    %221 = vmatprep.subr.mxu0 %v86
    %222 = vmatpush1.msra.mxu0 %v85
    %223 = vmatprep.subr.mxu0 %v89
    %224 = vmatpush1.msra.mxu0 %v88
    %225 = vmatprep.subr.mxu0 %v92
    %226 = vmatpush1.msra.mxu0 %v91
    %227 = vmatprep.subr.mxu0 %v95
    %228 = vmatpush1.msra.mxu0 %v94
    %229 = vmatprep.subr.mxu0 %v98
    %230 = vmatpush1.msra.mxu0 %v97
    %231 = vmatprep.subr.mxu0 %v101
    %232 = vmatpush1.msra.mxu0 %v100
    %233 = vmatprep.subr.mxu0 %v104
    %234 = vmatpush1.msra.mxu0 %v103
    %235 = vmatprep.subr.mxu0 %v107
    %236 = vmatpush1.msra.mxu0 %v106
    %237 = vmatprep.subr.mxu0 %v110
    %238 = vmatpush1.msra.mxu0 %v109
    %239 = vmatprep.subr.mxu0 %v113
    %240 = vmatpush1.msra.mxu0 %v112
    %241 = vmatprep.subr.mxu0 %v116
    %242 = vmatpush1.msra.mxu0 %v115
    %243 = vmatprep.subr.mxu0 %v119
    %244 = vmatpush1.msra.mxu0 %v118
    %245 = vmatprep.subr.mxu0 %v122
    %246 = vmatpush1.msra.mxu0 %v121
    %247 = vmatprep.subr.mxu0 %v125
    %248 = vmatpush1.msra.mxu0 %v124
    %249 = vmatprep.subr.mxu0 %v128
    %250 = vmatpush1.msra.mxu0 %v127
    %251 = vmatprep.subr.mxu0 %v131
    %252 = vmatpush1.msra.mxu0 %v130
    %253 = vmatprep.subr.mxu0 %v134
    %254 = vmatpush1.msra.mxu0 %v133
    %255 = vmatprep.subr.mxu0 %v137
    %256 = vmatpush1.msra.mxu0 %v136
    %257 = vmatprep.subr.mxu0 %v140
    %258 = vmatpush1.msra.mxu0 %v139
    %259 = vmatprep.subr.mxu0 %v143
    %260 = vmatpush1.msra.mxu0 %v142
    %261 = vmatprep.mubr.f32.mxu0 %v44
    %262 = vmatmul.mubr.f32.gmra.mrb[0].mxu0 %v43
    %v263 = vpop.f32.mrb[0].mxu0
    %v264 = vadd.f32 %v168, %v263
    %v265 = vpop.f32.mrb[0].mxu0
    %v266 = vadd.f32 %v172, %v265
    %267 = vmatprep.mubr.f32.mxu0 %v47
    %268 = vmatmul.mubr.f32.gmra.mrb[0].mxu0 %v46
    %v269 = vpop.f32.mrb[0].mxu0
    %v270 = vadd.f32 %v168, %v269
    %v271 = vpop.f32.mrb[0].mxu0
    %v272 = vadd.f32 %v172, %v271
    %273 = vdwg.mxu0
    %274 = vmatprep.subr.mxu0 %v146
    %275 = vmatpush1.msra.mxu0 %v145
    %276 = vmatprep.subr.mxu0 %v149
    %277 = vmatpush1.msra.mxu0 %v148
    %278 = vmatprep.subr.mxu0 %v152
    %279 = vmatpush1.msra.mxu0 %v151
    %280 = vmatprep.subr.mxu0 %v155
    %281 = vmatpush1.msra.mxu0 %v154
    %282 = vmatprep.subr.mxu0 %v158
    %283 = vmatpush1.msra.mxu0 %v157
    %284 = vmatprep.subr.mxu0 %v192
    %285 = vmatpush1.msra.mxu0 %v189
    %286 = vmatprep.subr.mxu0 0.0
    %287 = vmatpush1.msra.mxu0 0.0
    %288 = vmatprep.subr.mxu0 0.0
    %289 = vmatpush1.msra.mxu0 0.0
    %290 = vmatprep.subr.mxu0 0.0
    %291 = vmatpush1.msra.mxu0 0.0
    %292 = vmatprep.subr.mxu0 0.0
    %293 = vmatpush1.msra.mxu0 0.0
    %294 = vmatprep.subr.mxu0 0.0
    %295 = vmatpush1.msra.mxu0 0.0
    %296 = vmatprep.subr.mxu0 0.0
    %297 = vmatpush1.msra.mxu0 0.0
    %298 = vmatprep.subr.mxu0 0.0
    %299 = vmatpush1.msra.mxu0 0.0
    %300 = vmatprep.subr.mxu0 0.0
    %301 = vmatpush1.msra.mxu0 0.0
    %302 = vmatprep.subr.mxu0 0.0
    %303 = vmatpush1.msra.mxu0 0.0
    %304 = vmatprep.subr.mxu0 0.0
    %305 = vmatpush1.msra.mxu0 0.0
    %306 = vmatprep.subr.mxu0 0.0
    %307 = vmatpush1.msra.mxu0 0.0
    %308 = vmatprep.subr.mxu0 0.0
    %309 = vmatpush1.msra.mxu0 0.0
    %310 = vmatprep.subr.mxu0 0.0
    %311 = vmatpush1.msra.mxu0 0.0
    %312 = vmatprep.subr.mxu0 0.0
    %313 = vmatpush1.msra.mxu0 0.0
    %314 = vmatprep.subr.mxu0 0.0
    %315 = vmatpush1.msra.mxu0 0.0
    %316 = vmatprep.subr.mxu0 0.0
    %317 = vmatpush1.msra.mxu0 0.0
    %318 = vmatprep.subr.mxu0 0.0
    %319 = vmatpush1.msra.mxu0 0.0
    %320 = vmatprep.subr.mxu0 0.0
    %321 = vmatpush1.msra.mxu0 0.0
    %322 = vmatprep.subr.mxu0 0.0
    %323 = vmatpush1.msra.mxu0 0.0
    %324 = vmatprep.subr.mxu0 0.0
    %325 = vmatpush1.msra.mxu0 0.0
    %326 = vmatprep.subr.mxu0 0.0
    %327 = vmatpush1.msra.mxu0 0.0
    %328 = vmatprep.subr.mxu0 0.0
    %329 = vmatpush1.msra.mxu0 0.0
    %330 = vmatprep.subr.mxu0 0.0
    %331 = vmatpush1.msra.mxu0 0.0
    %332 = vmatprep.subr.mxu0 0.0
    %333 = vmatpush1.msra.mxu0 0.0
    %334 = vmatprep.subr.mxu0 0.0
    %335 = vmatpush1.msra.mxu0 0.0
    %336 = vmatprep.subr.mxu0 0.0
    %337 = vmatpush1.msra.mxu0 0.0
    %338 = vmatprep.mubr.f32.mxu0 0.0
    %339 = vmatmul.mubr.f32.gmra.mrb[0].mxu0 %v182
    %v340 = vpop.f32.mrb[0].mxu0
    %v341 = vadd.f32 %v264, %v340
    %v342 = vpop.f32.mrb[0].mxu0
    %v343 = vadd.f32 %v266, %v342
    %344 = vmatprep.mubr.f32.mxu0 0.0
    %345 = vmatmul.mubr.f32.gmra.mrb[0].mxu0 %v185
    %v346 = vpop.f32.mrb[0].mxu0
    %v347 = vadd.f32 %v270, %v346
    %v348 = vpop.f32.mrb[0].mxu0
    %v349 = vadd.f32 %v272, %v348
    %350 = vdwg.mxu0
    %351 = vmatprep.subr.mxu0 0.0
    %352 = vmatpush1.msra.mxu0 %v51
    %353 = vmatprep.subr.mxu0 0.0
    %354 = vmatpush1.msra.mxu0 %v54
    %355 = vmatprep.subr.mxu0 0.0
    %356 = vmatpush1.msra.mxu0 %v57
    %357 = vmatprep.subr.mxu0 0.0
    %358 = vmatpush1.msra.mxu0 %v60
    %359 = vmatprep.subr.mxu0 0.0
    %360 = vmatpush1.msra.mxu0 %v63
    %361 = vmatprep.subr.mxu0 0.0
    %362 = vmatpush1.msra.mxu0 %v66
    %363 = vmatprep.subr.mxu0 0.0
    %364 = vmatpush1.msra.mxu0 %v69
    %365 = vmatprep.subr.mxu0 0.0
    %366 = vmatpush1.msra.mxu0 %v72
    %367 = vmatprep.subr.mxu0 0.0
    %368 = vmatpush1.msra.mxu0 %v75
    %369 = vmatprep.subr.mxu0 0.0
    %370 = vmatpush1.msra.mxu0 %v78
    %371 = vmatprep.subr.mxu0 0.0
    %372 = vmatpush1.msra.mxu0 %v81
    %373 = vmatprep.subr.mxu0 0.0
    %374 = vmatpush1.msra.mxu0 %v84
    %375 = vmatprep.subr.mxu0 0.0
    %376 = vmatpush1.msra.mxu0 %v87
    %377 = vmatprep.subr.mxu0 0.0
    %378 = vmatpush1.msra.mxu0 %v90
    %379 = vmatprep.subr.mxu0 0.0
    %380 = vmatpush1.msra.mxu0 %v93
    %381 = vmatprep.subr.mxu0 0.0
    %382 = vmatpush1.msra.mxu0 %v96
    %383 = vmatprep.subr.mxu0 0.0
    %384 = vmatpush1.msra.mxu0 %v99
    %385 = vmatprep.subr.mxu0 0.0
    %386 = vmatpush1.msra.mxu0 %v102
    %387 = vmatprep.subr.mxu0 0.0
    %388 = vmatpush1.msra.mxu0 %v105
    %389 = vmatprep.subr.mxu0 0.0
    %390 = vmatpush1.msra.mxu0 %v108
    %391 = vmatprep.subr.mxu0 0.0
    %392 = vmatpush1.msra.mxu0 %v111
    %393 = vmatprep.subr.mxu0 0.0
    %394 = vmatpush1.msra.mxu0 %v114
    %395 = vmatprep.subr.mxu0 0.0
    %396 = vmatpush1.msra.mxu0 %v117
    %397 = vmatprep.subr.mxu0 0.0
    %398 = vmatpush1.msra.mxu0 %v120
    %399 = vmatprep.subr.mxu0 0.0
    %400 = vmatpush1.msra.mxu0 %v123
    %401 = vmatprep.subr.mxu0 0.0
    %402 = vmatpush1.msra.mxu0 %v126
    %403 = vmatprep.subr.mxu0 0.0
    %404 = vmatpush1.msra.mxu0 %v129
    %405 = vmatprep.subr.mxu0 0.0
    %406 = vmatpush1.msra.mxu0 %v132
    %407 = vmatprep.subr.mxu0 0.0
    %408 = vmatpush1.msra.mxu0 %v135
    %409 = vmatprep.subr.mxu0 0.0
    %410 = vmatpush1.msra.mxu0 %v138
    %411 = vmatprep.subr.mxu0 0.0
    %412 = vmatpush1.msra.mxu0 %v141
    %413 = vmatprep.subr.mxu0 0.0
    %414 = vmatpush1.msra.mxu0 %v144
    %415 = vmatprep.mubr.f32.mxu0 %v44
    %416 = vmatmul.mubr.f32.gmra.mrb[0].mxu0 %v43
    %v417 = vpop.f32.mrb[0].mxu0
    %v418 = vadd.f32 %v176, %v417
    %v419 = vpop.f32.mrb[0].mxu0
    %420 = vmatprep.mubr.f32.mxu0 %v47
    %421 = vmatmul.mubr.f32.gmra.mrb[0].mxu0 %v46
    %v422 = vpop.f32.mrb[0].mxu0
    %v423 = vadd.f32 %v176, %v422
    %v424 = vpop.f32.mrb[0].mxu0
    %425 = vdwg.mxu0
    %426 = vmatprep.subr.mxu0 0.0
    %427 = vmatpush1.msra.mxu0 %v147
    %428 = vmatprep.subr.mxu0 0.0
    %429 = vmatpush1.msra.mxu0 %v150
    %430 = vmatprep.subr.mxu0 0.0
    %431 = vmatpush1.msra.mxu0 %v153
    %432 = vmatprep.subr.mxu0 0.0
    %433 = vmatpush1.msra.mxu0 %v156
    %434 = vmatprep.subr.mxu0 0.0
    %435 = vmatpush1.msra.mxu0 %v159
    %436 = vmatprep.subr.mxu0 0.0
    %437 = vmatpush1.msra.mxu0 %v195
    %438 = vmatprep.subr.mxu0 0.0
    %439 = vmatpush1.msra.mxu0 0.0
    %440 = vmatprep.subr.mxu0 0.0
    %441 = vmatpush1.msra.mxu0 0.0
    %442 = vmatprep.subr.mxu0 0.0
    %443 = vmatpush1.msra.mxu0 0.0
    %444 = vmatprep.subr.mxu0 0.0
    %445 = vmatpush1.msra.mxu0 0.0
    %446 = vmatprep.subr.mxu0 0.0
    %447 = vmatpush1.msra.mxu0 0.0
    %448 = vmatprep.subr.mxu0 0.0
    %449 = vmatpush1.msra.mxu0 0.0
    %450 = vmatprep.subr.mxu0 0.0
    %451 = vmatpush1.msra.mxu0 0.0
    %452 = vmatprep.subr.mxu0 0.0
    %453 = vmatpush1.msra.mxu0 0.0
    %454 = vmatprep.subr.mxu0 0.0
    %455 = vmatpush1.msra.mxu0 0.0
    %456 = vmatprep.subr.mxu0 0.0
    %457 = vmatpush1.msra.mxu0 0.0
    %458 = vmatprep.subr.mxu0 0.0
    %459 = vmatpush1.msra.mxu0 0.0
    %460 = vmatprep.subr.mxu0 0.0
    %461 = vmatpush1.msra.mxu0 0.0
    %462 = vmatprep.subr.mxu0 0.0
    %463 = vmatpush1.msra.mxu0 0.0
    %464 = vmatprep.subr.mxu0 0.0
    %465 = vmatpush1.msra.mxu0 0.0
    %466 = vmatprep.subr.mxu0 0.0
    %467 = vmatpush1.msra.mxu0 0.0
    %468 = vmatprep.subr.mxu0 0.0
    %469 = vmatpush1.msra.mxu0 0.0
    %470 = vmatprep.subr.mxu0 0.0
    %471 = vmatpush1.msra.mxu0 0.0
    %472 = vmatprep.subr.mxu0 0.0
    %473 = vmatpush1.msra.mxu0 0.0
    %474 = vmatprep.subr.mxu0 0.0
    %475 = vmatpush1.msra.mxu0 0.0
    %476 = vmatprep.subr.mxu0 0.0
    %477 = vmatpush1.msra.mxu0 0.0
    %478 = vmatprep.subr.mxu0 0.0
    %479 = vmatpush1.msra.mxu0 0.0
    %480 = vmatprep.subr.mxu0 0.0
    %481 = vmatpush1.msra.mxu0 0.0
    %482 = vmatprep.subr.mxu0 0.0
    %483 = vmatpush1.msra.mxu0 0.0
    %484 = vmatprep.subr.mxu0 0.0
    %485 = vmatpush1.msra.mxu0 0.0
    %486 = vmatprep.subr.mxu0 0.0
    %487 = vmatpush1.msra.mxu0 0.0
    %488 = vmatprep.subr.mxu0 0.0
    %489 = vmatpush1.msra.mxu0 0.0
    %490 = vmatprep.mubr.f32.mxu0 0.0
    %491 = vmatmul.mubr.f32.gmra.mrb[0].mxu0 %v182
    %v492 = vpop.f32.mrb[0].mxu0
    %v493 = vadd.f32 %v418, %v492
    %v494 = vpop.f32.mrb[0].mxu0
    %495 = vmatprep.mubr.f32.mxu0 0.0
    %496 = vmatmul.mubr.f32.gmra.mrb[0].mxu0 %v185
    %v497 = vpop.f32.mrb[0].mxu0
    %v498 = vadd.f32 %v423, %v497
    %v499 = vpop.f32.mrb[0].mxu0
    %500 = vdwg.mxu0
    %501 = vst [vmem:[#allocation7] sm:$0xff] %v341
    %502 = vst [vmem:[#allocation7 + $0x8] sm:$0xff] %v343
    %503 = vst.msk [vmem:[#allocation7 + $0x10] sm:$0xff] %vm180, %v493
    %504 = vst [vmem:[#allocation7 + $0x18] sm:$0xff] %v347
    %505 = vst [vmem:[#allocation7 + $0x20] sm:$0xff] %v349
    %506 = vst.msk [vmem:[#allocation7 + $0x28] sm:$0xff] %vm180, %v498
    // Predicated region
    $region22: #{tpu_custom_call.1} parent=1 // pred_check
      _
    $region23: #{tpu_custom_call.1} parent=1 // pred_check_branch
      %508 = sbr.rel (0) target = $region25
    $region24: #{tpu_custom_call.1} parent=1 // pred_region
      %s510 = ssub.s32 768, 768
      %511 = vsyncadd [#allocation4], %s510
      %s512 = sshll.u32 [#allocation7], 4
      %s513 = int_to_ptr.vmem [resolvable:$true] %s512
      %518 = dma.vmem_to_hbm [thread:$0]  %s513, 768, %s3, [#allocation4], 384, 384, 24
    $region25: #{tpu_custom_call.1} parent=1 // pred_fallthru
      _
    // Predicated region
    $region26: #{tpu_custom_call.1} parent=1 // pred_check
      _
    $region27: #{tpu_custom_call.1} parent=1 // pred_check_branch
      %520 = sbr.rel (0) target = $region29
    $region28: #{tpu_custom_call.1} parent=1 // pred_region
      %521 = dma.done [#allocation4], 768
    $region29: #{tpu_custom_call.1} parent=1 // pred_fallthru
      _
    %522 = vsyncpa [#allocation3], 1
    %523 = vsyncpa [#allocation6], 1
    %524 = vsyncpa [#allocation4], 1

</llo_original>
